<compile_context>
chip_gen: v6e
topology: v6e:2x2x1
jax: 0.10.0
libtpu: 0.0.40
codegen_flags: <defaults>
</compile_context>

<pallas_src>
import functools

import jax
import jax.numpy as jnp
from jax.experimental import pallas as pl
from jax.experimental.pallas import tpu as pltpu

_LANE = 128
_SUBLANE = 8


def _round_up(n, m):
    return ((n + m - 1) // m) * m


def _softplus(x):
    # Single-exp, overflow-safe softplus: softplus(x) = max(x, 0) + log1p(exp(-|x|)).
    return jnp.maximum(x, 0.0) + jnp.log1p(jnp.exp(-jnp.abs(x)))


def vae_kernel(x_ref, eps_ref,
               w1_ref, b1_ref,
               wmv_ref, bmv_ref,
               wd1_ref, bd1_ref,
               wd2_ref, bd2_ref,
               y_ref, z_ref, *, lf_pad):
    x = x_ref[...]

    # ----- encoder -----
    h = jnp.dot(x, w1_ref[...], preferred_element_type=jnp.float32) + b1_ref[...]
    h = jnp.maximum(h, 0.0)                                   # relu
    # fused mean|var head: one MXU pass; slices are 128-lane aligned -> free
    mv = jnp.dot(h, wmv_ref[...], preferred_element_type=jnp.float32) + bmv_ref[...]
    mean = mv[:, :lf_pad]
    var = _softplus(mv[:, lf_pad:])

    # ----- reparameterization: z = mean + sqrt(var) * eps -----
    z = mean + jnp.sqrt(var) * eps_ref[...]

    # ----- decoder -----
    d = jnp.dot(z, wd1_ref[...], preferred_element_type=jnp.float32) + bd1_ref[...]
    d = jnp.maximum(d, 0.0)                                   # relu
    logits = jnp.dot(d, wd2_ref[...], preferred_element_type=jnp.float32) + bd2_ref[...]

    y_ref[...] = jax.nn.sigmoid(logits).astype(y_ref.dtype)
    z_ref[...] = z.astype(z_ref.dtype)


@functools.partial(jax.jit, static_argnames=("block_b",))
def vae_forward(x, eps, params, block_b=None):
    """x: (B, in_ftr), eps: (B, lf). Returns (reconstruction (B, in_ftr), z (B, lf))."""
    B, in_ftr = x.shape
    lf = eps.shape[1]
    w1, b1, wm, bm, wv, bv, wd1, bd1, wd2, bd2 = params
    nef = w1.shape[1]
    ndf = wd1.shape[1]

    # lane-dense padded feature dims (multiples of 128)
    Pin = _round_up(in_ftr, _LANE)
    Plf = _round_up(lf, _LANE)
    Pnef = _round_up(nef, _LANE)
    Pndf = _round_up(ndf, _LANE)

    # batch tiling: whole batch in a single grid step when small; otherwise pick the
    # largest sublane-aligned tile that keeps (double-buffered activations + resident
    # weights) comfortably inside VMEM on every current chip (v7x has only 64 MiB).
    if block_b is None:
        weight_bytes = 4 * (Pin * Pnef + Pnef * 2 * Plf + Plf * Pndf + Pndf * Pin
                            + Pnef + 2 * Plf + Pndf + Pin)
        act_row_bytes = 4 * 2 * (2 * Pin + 2 * Plf)           # x/eps/y/z, double-buffered
        budget = 40 * 1024 * 1024                             # conservative, fits v5e/v6e/v7x
        rows = max((budget - weight_bytes) // act_row_bytes, _SUBLANE)
        block_b = int(min(_round_up(B, _SUBLANE),
                          _round_up(min(rows, 1024), _SUBLANE)))
    block_b = max(_SUBLANE, _round_up(block_b, _SUBLANE))
    B_pad = _round_up(B, block_b)          # guards against ragged batches (no truncation)
    grid = (B_pad // block_b,)
    # TODO(synk): for MNIST-scale hidden dims the whole weight set still fits VMEM; if
    # Pnef/Pndf ever grow past a few thousand, add a K-tiled grid axis for the matmuls.

    f32 = jnp.float32

    def pad2(a, rows, cols):
        a = a.astype(f32)
        return jnp.pad(a, ((0, rows - a.shape[0]), (0, cols - a.shape[1])))

    xp = pad2(x, B_pad, Pin)
    epsp = pad2(eps, B_pad, Plf)
    w1p = pad2(w1, Pin, Pnef)
    b1p = pad2(b1.reshape(1, -1), 1, Pnef)
    # fused mean|var head weights/biases
    wmvp = jnp.concatenate([pad2(wm, Pnef, Plf), pad2(wv, Pnef, Plf)], axis=1)
    bmvp = jnp.concatenate([pad2(bm.reshape(1, -1), 1, Plf),
                            pad2(bv.reshape(1, -1), 1, Plf)], axis=1)
    wd1p = pad2(wd1, Plf, Pndf)
    bd1p = pad2(bd1.reshape(1, -1), 1, Pndf)
    wd2p = pad2(wd2, Pndf, Pin)
    bd2p = pad2(bd2.reshape(1, -1), 1, Pin)

    def batch_spec(cols):
        return pl.BlockSpec((block_b, cols), lambda i: (i, 0))

    def full_spec(shape):
        # Weights/biases: same block for every grid step -> DMA'd once, stays resident.
        return pl.BlockSpec(shape, lambda i: (0, 0))

    in_specs = [
        batch_spec(Pin),                   # x
        batch_spec(Plf),                   # eps
        full_spec(w1p.shape), full_spec(b1p.shape),
        full_spec(wmvp.shape), full_spec(bmvp.shape),
        full_spec(wd1p.shape), full_spec(bd1p.shape),
        full_spec(wd2p.shape), full_spec(bd2p.shape),
    ]
    out_specs = (batch_spec(Pin), batch_spec(Plf))

    flops = 2 * B_pad * (Pin * Pnef + Pnef * (2 * Plf) + Plf * Pndf + Pndf * Pin)
    transcendentals = B_pad * (3 * Plf + 2 * Pin)   # softplus(exp,log1p)+sqrt, sigmoid
    bytes_accessed = 4 * (
        xp.size + epsp.size
        + w1p.size + b1p.size + wmvp.size + bmvp.size
        + wd1p.size + bd1p.size + wd2p.size + bd2p.size
        + B_pad * Pin + B_pad * Plf)

    y_pad, z_pad = pl.pallas_call(
        functools.partial(vae_kernel, lf_pad=Plf),
        out_shape=(
            jax.ShapeDtypeStruct((B_pad, Pin), f32),
            jax.ShapeDtypeStruct((B_pad, Plf), f32),
        ),
        grid_spec=pltpu.PrefetchScalarGridSpec(
            num_scalar_prefetch=0,
            grid=grid,
            in_specs=in_specs,
            out_specs=out_specs,
        ),
        compiler_params=pltpu.CompilerParams(
            dimension_semantics=("parallel",),
        ),
        cost_estimate=pl.CostEstimate(
            flops=flops,
            transcendentals=transcendentals,
            bytes_accessed=bytes_accessed,
        ),
    )(xp, epsp, w1p, b1p, wmvp, bmvp, wd1p, bd1p, wd2p, bd2p)

    # strip batch + lane padding
    return y_pad[:B, :in_ftr], z_pad[:B, :lf]


def init_linear(key, fan_in, fan_out):
    """Deterministic init mimicking nn.Linear (uniform +-1/sqrt(fan_in)).
    Stored as (in, out) so the kernel does x @ W (PyTorch stores (out, in))."""
    kw, kb = jax.random.split(key)
    bound = 1.0 / jnp.sqrt(fan_in)
    w = jax.random.uniform(kw, (fan_in, fan_out), jnp.float32, -bound, bound)
    b = jax.random.uniform(kb, (1, fan_out), jnp.float32, -bound, bound)
    return w, b


if __name__ == "__main__":
    # small shapes consistent with the module: VAE(in_ftr, lf, nef, ndf)
    B, in_ftr, lf, nef, ndf = 16, 64, 16, 32, 32

    key = jax.random.PRNGKey(0)
    kx, keps, k1, k2, k3, k4, k5 = jax.random.split(key, 7)

    x = jax.random.uniform(kx, (B, in_ftr), jnp.float32)       # input batch
    eps = jax.random.normal(keps, (B, lf), jnp.float32)        # reparameterization noise
    # TODO(synk): torch.randn inside latent_variable is drawn per-call; here eps is
    # drawn in plain JAX and passed to the kernel for determinism.

    w1, b1 = init_linear(k1, in_ftr, nef)       # encoder.l1
    wm, bm = init_linear(k2, nef, lf)           # encoder.l_mean
    wv, bv = init_linear(k3, nef, lf)           # encoder.l_var
    wd1, bd1 = init_linear(k4, lf, ndf)         # decoder.l1
    wd2, bd2 = init_linear(k5, ndf, in_ftr)     # decoder.l2

    params = (w1, b1, wm, bm, wv, bv, wd1, bd1, wd2, bd2)

    y, z = vae_forward(x, eps, params)          # whole batch in one grid step
    jax.block_until_ready((y, z))

    # reference check in plain JAX
    h = jnp.maximum(x @ w1 + b1, 0.0)
    mean = h @ wm + bm
    var = jax.nn.softplus(h @ wv + bv)
    z_ref = mean + jnp.sqrt(var) * eps
    d = jnp.maximum(z_ref @ wd1 + bd1, 0.0)
    y_ref = jax.nn.sigmoid(d @ wd2 + bd2)

    assert y.shape == (B, in_ftr) and z.shape == (B, lf)
    assert jnp.allclose(y, y_ref, atol=1e-5, rtol=1e-5), "reconstruction mismatch"
    assert jnp.allclose(z, z_ref, atol=1e-5, rtol=1e-5), "latent mismatch"

    print("KERNEL_OK")
</pallas_src>

<mosaic_0001>
module attributes {stable_mosaic.version = 11 : i64} {
  func.func @vae_kernel(%arg0: i32, %arg1: memref<16x128xf32, #tpu.memory_space<vmem>>, %arg2: memref<16x128xf32, #tpu.memory_space<vmem>>, %arg3: memref<128x128xf32, #tpu.memory_space<vmem>>, %arg4: memref<1x128xf32, #tpu.memory_space<vmem>>, %arg5: memref<128x256xf32, #tpu.memory_space<vmem>>, %arg6: memref<1x256xf32, #tpu.memory_space<vmem>>, %arg7: memref<128x128xf32, #tpu.memory_space<vmem>>, %arg8: memref<1x128xf32, #tpu.memory_space<vmem>>, %arg9: memref<128x128xf32, #tpu.memory_space<vmem>>, %arg10: memref<1x128xf32, #tpu.memory_space<vmem>>, %arg11: memref<16x128xf32, #tpu.memory_space<vmem>>, %arg12: memref<16x128xf32, #tpu.memory_space<vmem>>) attributes {dimension_semantics = [#tpu.dimension_semantics<parallel>], iteration_bounds = array<i64: 1>, scalar_prefetch = 0 : i64, scratch_operands = 0 : i64, tpu.core_type = #tpu.core_type<tc>, window_params = [{transform_indices = @transform_0, window_bounds = array<i64: 16, 128>}, {transform_indices = @transform_1, window_bounds = array<i64: 16, 128>}, {pipeline_mode = #tpu.pipeline_mode<synchronous>, transform_indices = @transform_2, window_bounds = array<i64: 128, 128>}, {pipeline_mode = #tpu.pipeline_mode<synchronous>, transform_indices = @transform_3, window_bounds = array<i64: 1, 128>}, {pipeline_mode = #tpu.pipeline_mode<synchronous>, transform_indices = @transform_4, window_bounds = array<i64: 128, 256>}, {pipeline_mode = #tpu.pipeline_mode<synchronous>, transform_indices = @transform_5, window_bounds = array<i64: 1, 256>}, {pipeline_mode = #tpu.pipeline_mode<synchronous>, transform_indices = @transform_6, window_bounds = array<i64: 128, 128>}, {pipeline_mode = #tpu.pipeline_mode<synchronous>, transform_indices = @transform_7, window_bounds = array<i64: 1, 128>}, {pipeline_mode = #tpu.pipeline_mode<synchronous>, transform_indices = @transform_8, window_bounds = array<i64: 128, 128>}, {pipeline_mode = #tpu.pipeline_mode<synchronous>, transform_indices = @transform_9, window_bounds = array<i64: 1, 128>}, {transform_indices = @transform_10, window_bounds = array<i64: 16, 128>}, {transform_indices = @transform_11, window_bounds = array<i64: 16, 128>}]} {
    %c0 = arith.constant 0 : index
    %c0_0 = arith.constant 0 : index
    %0 = vector.load %arg1[%c0, %c0_0] : memref<16x128xf32, #tpu.memory_space<vmem>>, vector<16x128xf32>
    %c0_1 = arith.constant 0 : index
    %c0_2 = arith.constant 0 : index
    %1 = vector.load %arg3[%c0_1, %c0_2] : memref<128x128xf32, #tpu.memory_space<vmem>>, vector<128x128xf32>
    %cst = arith.constant dense<0.000000e+00> : vector<16x128xf32>
    %2 = tpu.matmul %0, %1, %cst {dimension_numbers = #tpu.dot_dimension_numbers<[1], [0], [0], [1], [0, 0, 1, 1], [], []>} : vector<16x128xf32>, vector<128x128xf32>, vector<16x128xf32> -> vector<16x128xf32>
    %c0_3 = arith.constant 0 : index
    %c0_4 = arith.constant 0 : index
    %3 = vector.load %arg4[%c0_3, %c0_4] : memref<1x128xf32, #tpu.memory_space<vmem>>, vector<1x128xf32>
    %4 = vector.broadcast %3 : vector<1x128xf32> to vector<16x128xf32>
    %5 = arith.addf %2, %4 : vector<16x128xf32>
    %cst_5 = arith.constant 0.000000e+00 : f32
    %6 = vector.broadcast %cst_5 : f32 to vector<16x128xf32>
    %7 = arith.maximumf %5, %6 : vector<16x128xf32>
    %c0_6 = arith.constant 0 : index
    %c0_7 = arith.constant 0 : index
    %8 = vector.load %arg5[%c0_6, %c0_7] : memref<128x256xf32, #tpu.memory_space<vmem>>, vector<128x256xf32>
    %cst_8 = arith.constant dense<0.000000e+00> : vector<16x256xf32>
    %9 = tpu.matmul %7, %8, %cst_8 {dimension_numbers = #tpu.dot_dimension_numbers<[1], [0], [0], [1], [0, 0, 1, 1], [], []>} : vector<16x128xf32>, vector<128x256xf32>, vector<16x256xf32> -> vector<16x256xf32>
    %c0_9 = arith.constant 0 : index
    %c0_10 = arith.constant 0 : index
    %10 = vector.load %arg6[%c0_9, %c0_10] : memref<1x256xf32, #tpu.memory_space<vmem>>, vector<1x256xf32>
    %11 = vector.broadcast %10 : vector<1x256xf32> to vector<16x256xf32>
    %12 = arith.addf %9, %11 : vector<16x256xf32>
    %13 = vector.extract_strided_slice %12 {offsets = [0, 0], sizes = [16, 128], strides = [1, 1]} : vector<16x256xf32> to vector<16x128xf32>
    %14 = vector.extract_strided_slice %12 {offsets = [0, 128], sizes = [16, 128], strides = [1, 1]} : vector<16x256xf32> to vector<16x128xf32>
    %cst_11 = arith.constant 0.000000e+00 : f32
    %15 = vector.broadcast %cst_11 : f32 to vector<16x128xf32>
    %16 = arith.maximumf %14, %15 : vector<16x128xf32>
    %17 = math.absf %14 : vector<16x128xf32>
    %cst_12 = arith.constant 0.000000e+00 : f32
    %18 = vector.broadcast %cst_12 : f32 to vector<16x128xf32>
    %19 = arith.subf %18, %17 : vector<16x128xf32>
    %20 = math.exp %19 : vector<16x128xf32>
    %21 = math.log1p %20 : vector<16x128xf32>
    %22 = arith.addf %16, %21 : vector<16x128xf32>
    %23 = math.sqrt %22 : vector<16x128xf32>
    %c0_13 = arith.constant 0 : index
    %c0_14 = arith.constant 0 : index
    %24 = vector.load %arg2[%c0_13, %c0_14] : memref<16x128xf32, #tpu.memory_space<vmem>>, vector<16x128xf32>
    %25 = arith.mulf %23, %24 : vector<16x128xf32>
    %26 = arith.addf %13, %25 : vector<16x128xf32>
    %c0_15 = arith.constant 0 : index
    %c0_16 = arith.constant 0 : index
    %27 = vector.load %arg7[%c0_15, %c0_16] : memref<128x128xf32, #tpu.memory_space<vmem>>, vector<128x128xf32>
    %cst_17 = arith.constant dense<0.000000e+00> : vector<16x128xf32>
    %28 = tpu.matmul %26, %27, %cst_17 {dimension_numbers = #tpu.dot_dimension_numbers<[1], [0], [0], [1], [0, 0, 1, 1], [], []>} : vector<16x128xf32>, vector<128x128xf32>, vector<16x128xf32> -> vector<16x128xf32>
    %c0_18 = arith.constant 0 : index
    %c0_19 = arith.constant 0 : index
    %29 = vector.load %arg8[%c0_18, %c0_19] : memref<1x128xf32, #tpu.memory_space<vmem>>, vector<1x128xf32>
    %30 = vector.broadcast %29 : vector<1x128xf32> to vector<16x128xf32>
    %31 = arith.addf %28, %30 : vector<16x128xf32>
    %cst_20 = arith.constant 0.000000e+00 : f32
    %32 = vector.broadcast %cst_20 : f32 to vector<16x128xf32>
    %33 = arith.maximumf %31, %32 : vector<16x128xf32>
    %c0_21 = arith.constant 0 : index
    %c0_22 = arith.constant 0 : index
    %34 = vector.load %arg9[%c0_21, %c0_22] : memref<128x128xf32, #tpu.memory_space<vmem>>, vector<128x128xf32>
    %cst_23 = arith.constant dense<0.000000e+00> : vector<16x128xf32>
    %35 = tpu.matmul %33, %34, %cst_23 {dimension_numbers = #tpu.dot_dimension_numbers<[1], [0], [0], [1], [0, 0, 1, 1], [], []>} : vector<16x128xf32>, vector<128x128xf32>, vector<16x128xf32> -> vector<16x128xf32>
    %c0_24 = arith.constant 0 : index
    %c0_25 = arith.constant 0 : index
    %36 = vector.load %arg10[%c0_24, %c0_25] : memref<1x128xf32, #tpu.memory_space<vmem>>, vector<1x128xf32>
    %37 = vector.broadcast %36 : vector<1x128xf32> to vector<16x128xf32>
    %38 = arith.addf %35, %37 : vector<16x128xf32>
    %39 = arith.negf %38 : vector<16x128xf32>
    %40 = math.exp %39 : vector<16x128xf32>
    %cst_26 = arith.constant 1.000000e+00 : f32
    %41 = vector.broadcast %cst_26 : f32 to vector<16x128xf32>
    %42 = arith.addf %41, %40 : vector<16x128xf32>
    %43 = arith.divf %41, %42 : vector<16x128xf32>
    %c0_27 = arith.constant 0 : index
    %c0_28 = arith.constant 0 : index
    %44 = vector.load %arg11[%c0_27, %c0_28] : memref<16x128xf32, #tpu.memory_space<vmem>>, vector<16x128xf32>
    tpu.vector_store %arg11[%c0_27, %c0_28], %43 {strides = array<i32>} : memref<16x128xf32, #tpu.memory_space<vmem>>, vector<16x128xf32>,
    %c0_29 = arith.constant 0 : index
    %c0_30 = arith.constant 0 : index
    %45 = vector.load %arg12[%c0_29, %c0_30] : memref<16x128xf32, #tpu.memory_space<vmem>>, vector<16x128xf32>
    tpu.vector_store %arg12[%c0_29, %c0_30], %26 {strides = array<i32>} : memref<16x128xf32, #tpu.memory_space<vmem>>, vector<16x128xf32>,
    return
  }
  func.func @transform_0(%arg0: i32) -> (i32, i32) {
    %c0_i32 = arith.constant 0 : i32
    %c0_i32_0 = arith.constant 0 : i32
    return %arg0, %c0_i32 : i32, i32
  }
  func.func @transform_1(%arg0: i32) -> (i32, i32) {
    %c0_i32 = arith.constant 0 : i32
    %c0_i32_0 = arith.constant 0 : i32
    return %arg0, %c0_i32 : i32, i32
  }
  func.func @transform_2(%arg0: i32) -> (i32, i32) {
    %c0_i32 = arith.constant 0 : i32
    %c0_i32_0 = arith.constant 0 : i32
    %c0_i32_1 = arith.constant 0 : i32
    return %c0_i32, %c0_i32_0 : i32, i32
  }
  func.func @transform_3(%arg0: i32) -> (i32, i32) {
    %c0_i32 = arith.constant 0 : i32
    %c0_i32_0 = arith.constant 0 : i32
    %c0_i32_1 = arith.constant 0 : i32
    return %c0_i32, %c0_i32_0 : i32, i32
  }
  func.func @transform_4(%arg0: i32) -> (i32, i32) {
    %c0_i32 = arith.constant 0 : i32
    %c0_i32_0 = arith.constant 0 : i32
    %c0_i32_1 = arith.constant 0 : i32
    return %c0_i32, %c0_i32_0 : i32, i32
  }
  func.func @transform_5(%arg0: i32) -> (i32, i32) {
    %c0_i32 = arith.constant 0 : i32
    %c0_i32_0 = arith.constant 0 : i32
    %c0_i32_1 = arith.constant 0 : i32
    return %c0_i32, %c0_i32_0 : i32, i32
  }
  func.func @transform_6(%arg0: i32) -> (i32, i32) {
    %c0_i32 = arith.constant 0 : i32
    %c0_i32_0 = arith.constant 0 : i32
    %c0_i32_1 = arith.constant 0 : i32
    return %c0_i32, %c0_i32_0 : i32, i32
  }
  func.func @transform_7(%arg0: i32) -> (i32, i32) {
    %c0_i32 = arith.constant 0 : i32
    %c0_i32_0 = arith.constant 0 : i32
    %c0_i32_1 = arith.constant 0 : i32
    return %c0_i32, %c0_i32_0 : i32, i32
  }
  func.func @transform_8(%arg0: i32) -> (i32, i32) {
    %c0_i32 = arith.constant 0 : i32
    %c0_i32_0 = arith.constant 0 : i32
    %c0_i32_1 = arith.constant 0 : i32
    return %c0_i32, %c0_i32_0 : i32, i32
  }
  func.func @transform_9(%arg0: i32) -> (i32, i32) {
    %c0_i32 = arith.constant 0 : i32
    %c0_i32_0 = arith.constant 0 : i32
    %c0_i32_1 = arith.constant 0 : i32
    return %c0_i32, %c0_i32_0 : i32, i32
  }
  func.func @transform_10(%arg0: i32) -> (i32, i32) {
    %c0_i32 = arith.constant 0 : i32
    %c0_i32_0 = arith.constant 0 : i32
    return %arg0, %c0_i32 : i32, i32
  }
  func.func @transform_11(%arg0: i32) -> (i32, i32) {
    %c0_i32 = arith.constant 0 : i32
    %c0_i32_0 = arith.constant 0 : i32
    return %arg0, %c0_i32 : i32, i32
  }
}

</mosaic_0001>

<llo_original>
// kernel: vae_forward.1
$region0: #{vae_forward.1}
  #allocation0 [shape = 'u32[]', space=smem, size = 0x4, offset = 0x4, fixed_abs, tag = 'smem constant byte address 0x4 - core index']
  #allocation1 [shape = 'u32[144,128]{1,0:T(1,128)}', space=vmem, size = 0x12000, scoped, tag = 'internal scratch']
  %s0 = inlined_call_operand.vmem [shape: f32[16,128], index: 0, kind: input, shape index: {}]
  %s1 = inlined_call_operand.vmem [shape: f32[16,128], index: 1, kind: input, shape index: {}]
  %s2 = inlined_call_operand.vmem [shape: f32[128,128], index: 2, kind: input, shape index: {}]
  %s3 = inlined_call_operand.vmem [shape: f32[1,128], index: 3, kind: input, shape index: {}]
  %s4 = inlined_call_operand.vmem [shape: f32[128,256], index: 4, kind: input, shape index: {}]
  %s5 = inlined_call_operand.vmem [shape: f32[1,256], index: 5, kind: input, shape index: {}]
  %s6 = inlined_call_operand.vmem [shape: f32[128,128], index: 6, kind: input, shape index: {}]
  %s7 = inlined_call_operand.vmem [shape: f32[1,128], index: 7, kind: input, shape index: {}]
  %s8 = inlined_call_operand.vmem [shape: f32[128,128], index: 8, kind: input, shape index: {}]
  %s9 = inlined_call_operand.vmem [shape: f32[1,128], index: 9, kind: input, shape index: {}]
  %s10 = inlined_call_operand.hbm [shape: f32[16,128], index: 10, kind: output, shape index: {0}]
  %s11 = inlined_call_operand.hbm [shape: f32[16,128], index: 11, kind: output, shape index: {1}]
  %12 = xla_tuple %s10, %s11
  %s13 = sld [smem:[#allocation0]]
  $region58: #{vae_forward.1} parent=0
    _
  %s15 = ssub.s32 1, %s13
  %s16 = scalar_select 0, %s15, %s13
  $region1: #{vae_forward.1} parent=0
    #allocation2 [shape = 'u8[8192]{0}', space=vmem, size = 0x2000, scoped, tag = 'output window, operand 0, single buffered']
    #allocation3 [shape = 's32[1]{0}', space=sflag, size = 0x4, scoped, tag = 'scoped memory for vae_forward.1']
    #allocation4 [shape = 'u8[8192]{0}', space=vmem, size = 0x2000, scoped, tag = 'output window, operand 1, single buffered']
    #allocation5 [shape = 's32[1]{0}', space=sflag, size = 0x4, scoped, tag = 'scoped memory for vae_forward.1']
    %17 = vsyncpa [#allocation3], 0
    %18 = vsyncpa [#allocation5], 0
    // Predicated region
    $region2: #{vae_forward.1} parent=1 // pred_check
      _
    $region3: #{vae_forward.1} parent=1 // pred_check_branch
      %20 = sbr.rel (0) target = $region5
    $region4: #{vae_forward.1} parent=1 // pred_region
      _
    $region5: #{vae_forward.1} parent=1 // pred_fallthru
      _
    // Predicated region
    $region6: #{vae_forward.1} parent=1 // pred_check
      _
    $region7: #{vae_forward.1} parent=1 // pred_check_branch
      %22 = sbr.rel (0) target = $region9
    $region8: #{vae_forward.1} parent=1 // pred_region
      _
    $region9: #{vae_forward.1} parent=1 // pred_fallthru
      _
    // Predicated region
    $region10: #{vae_forward.1} parent=1 // pred_check
      _
    $region11: #{vae_forward.1} parent=1 // pred_check_branch
      %24 = sbr.rel (0) target = $region13
    $region12: #{vae_forward.1} parent=1 // pred_region
      _
    $region13: #{vae_forward.1} parent=1 // pred_fallthru
      _
    // Predicated region
    $region14: #{vae_forward.1} parent=1 // pred_check
      _
    $region15: #{vae_forward.1} parent=1 // pred_check_branch
      %26 = sbr.rel (0) target = $region17
    $region16: #{vae_forward.1} parent=1 // pred_region
      _
    $region17: #{vae_forward.1} parent=1 // pred_fallthru
      _
    // Predicated region
    $region18: #{vae_forward.1} parent=1 // pred_check
      _
    $region19: #{vae_forward.1} parent=1 // pred_check_branch
      %28 = sbr.rel (0) target = $region21
    $region20: #{vae_forward.1} parent=1 // pred_region
      _
    $region21: #{vae_forward.1} parent=1 // pred_fallthru
      _
    // Predicated region
    $region22: #{vae_forward.1} parent=1 // pred_check
      _
    $region23: #{vae_forward.1} parent=1 // pred_check_branch
      %30 = sbr.rel (0) target = $region25
    $region24: #{vae_forward.1} parent=1 // pred_region
      _
    $region25: #{vae_forward.1} parent=1 // pred_fallthru
      _
    // Predicated region
    $region26: #{vae_forward.1} parent=1 // pred_check
      _
    $region27: #{vae_forward.1} parent=1 // pred_check_branch
      %32 = sbr.rel (0) target = $region29
    $region28: #{vae_forward.1} parent=1 // pred_region
      _
    $region29: #{vae_forward.1} parent=1 // pred_fallthru
      _
    // Predicated region
    $region30: #{vae_forward.1} parent=1 // pred_check
      _
    $region31: #{vae_forward.1} parent=1 // pred_check_branch
      %34 = sbr.rel (0) target = $region33
    $region32: #{vae_forward.1} parent=1 // pred_region
      _
    $region33: #{vae_forward.1} parent=1 // pred_fallthru
      _
    // Predicated region
    $region34: #{vae_forward.1} parent=1 // pred_check
      _
    $region35: #{vae_forward.1} parent=1 // pred_check_branch
      %36 = sbr.rel (0) target = $region37
    $region36: #{vae_forward.1} parent=1 // pred_region
      _
    $region37: #{vae_forward.1} parent=1 // pred_fallthru
      _
    // Predicated region
    $region38: #{vae_forward.1} parent=1 // pred_check
      _
    $region39: #{vae_forward.1} parent=1 // pred_check_branch
      %38 = sbr.rel (0) target = $region41
    $region40: #{vae_forward.1} parent=1 // pred_region
      _
    $region41: #{vae_forward.1} parent=1 // pred_fallthru
      _
    %v39 = vld [vmem:[%s0] sm:$0xff]
    %v40 = vld [vmem:[%s0 + $0x8] sm:$0xff]
    %v41 = vld [vmem:[%s2] sm:$0xff]
    %v42 = vld [vmem:[%s2 + $0x8] sm:$0xff]
    %v43 = vld [vmem:[%s2 + $0x10] sm:$0xff]
    %v44 = vld [vmem:[%s2 + $0x18] sm:$0xff]
    %v45 = vld [vmem:[%s2 + $0x20] sm:$0xff]
    %v46 = vld [vmem:[%s2 + $0x28] sm:$0xff]
    %v47 = vld [vmem:[%s2 + $0x30] sm:$0xff]
    %v48 = vld [vmem:[%s2 + $0x38] sm:$0xff]
    %v49 = vld [vmem:[%s2 + $0x40] sm:$0xff]
    %v50 = vld [vmem:[%s2 + $0x48] sm:$0xff]
    %v51 = vld [vmem:[%s2 + $0x50] sm:$0xff]
    %v52 = vld [vmem:[%s2 + $0x58] sm:$0xff]
    %v53 = vld [vmem:[%s2 + $0x60] sm:$0xff]
    %v54 = vld [vmem:[%s2 + $0x68] sm:$0xff]
    %v55 = vld [vmem:[%s2 + $0x70] sm:$0xff]
    %v56 = vld [vmem:[%s2 + $0x78] sm:$0xff]
    %v57 = vld [vmem:[%s3] sm:$0x1]
    %v59 = vlaneseq
    %v60 = vshrl.u32 %v59, 7
    %v61 = vsub.s32 0, %v60
    %v62 = vrot.slane %v57, %v61
    %64 = vmatprep.subr.mxu0 0.0
    %65 = vmatpush1.msra.mxu0 %v56
    %66 = vmatprep.subr.mxu0 0.0
    %67 = vmatpush1.msra.mxu0 %v55
    %68 = vmatprep.subr.mxu0 0.0
    %69 = vmatpush1.msra.mxu0 %v54
    %70 = vmatprep.subr.mxu0 0.0
    %71 = vmatpush1.msra.mxu0 %v53
    %72 = vmatprep.subr.mxu0 0.0
    %73 = vmatpush1.msra.mxu0 %v52
    %74 = vmatprep.subr.mxu0 0.0
    %75 = vmatpush1.msra.mxu0 %v51
    %76 = vmatprep.subr.mxu0 0.0
    %77 = vmatpush1.msra.mxu0 %v50
    %78 = vmatprep.subr.mxu0 0.0
    %79 = vmatpush1.msra.mxu0 %v49
    %80 = vmatprep.subr.mxu0 0.0
    %81 = vmatpush1.msra.mxu0 %v48
    %82 = vmatprep.subr.mxu0 0.0
    %83 = vmatpush1.msra.mxu0 %v47
    %84 = vmatprep.subr.mxu0 0.0
    %85 = vmatpush1.msra.mxu0 %v46
    %86 = vmatprep.subr.mxu0 0.0
    %87 = vmatpush1.msra.mxu0 %v45
    %88 = vmatprep.subr.mxu0 0.0
    %89 = vmatpush1.msra.mxu0 %v44
    %90 = vmatprep.subr.mxu0 0.0
    %91 = vmatpush1.msra.mxu0 %v43
    %92 = vmatprep.subr.mxu0 0.0
    %93 = vmatpush1.msra.mxu0 %v42
    %94 = vmatprep.subr.mxu0 0.0
    %95 = vmatpush1.msra.mxu0 %v41
    %96 = vmatprep.subr.mxu0 0.0
    %97 = vmatpush2.msra.mxu0 0.0
    %98 = vmatprep.subr.mxu0 0.0
    %99 = vmatpush2.msra.mxu0 0.0
    %100 = vmatprep.subr.mxu0 0.0
    %101 = vmatpush2.msra.mxu0 0.0
    %102 = vmatprep.subr.mxu0 0.0
    %103 = vmatpush2.msra.mxu0 0.0
    %104 = vmatprep.subr.mxu0 0.0
    %105 = vmatpush2.msra.mxu0 0.0
    %106 = vmatprep.subr.mxu0 0.0
    %107 = vmatpush2.msra.mxu0 0.0
    %108 = vmatprep.subr.mxu0 0.0
    %109 = vmatpush2.msra.mxu0 0.0
    %110 = vmatprep.subr.mxu0 0.0
    %111 = vmatpush2.msra.mxu0 0.0
    %112 = vmatprep.subr.mxu0 0.0
    %113 = vmatpush2.msra.mxu0 0.0
    %114 = vmatprep.subr.mxu0 0.0
    %115 = vmatpush2.msra.mxu0 0.0
    %116 = vmatprep.subr.mxu0 0.0
    %117 = vmatpush2.msra.mxu0 0.0
    %118 = vmatprep.subr.mxu0 0.0
    %119 = vmatpush2.msra.mxu0 0.0
    %120 = vmatprep.subr.mxu0 0.0
    %121 = vmatpush2.msra.mxu0 0.0
    %122 = vmatprep.subr.mxu0 0.0
    %123 = vmatpush2.msra.mxu0 0.0
    %124 = vmatprep.subr.mxu0 0.0
    %125 = vmatpush2.msra.mxu0 0.0
    %126 = vmatprep.subr.mxu0 0.0
    %127 = vmatpush2.msra.mxu0 0.0
    %128 = vmatprep.mubr.f32.mxu0 0.0
    %129 = vmatmul.mubr.f32.gmra.mxu0 %v39
    %v130 = vpop.f32.mrf.mxu0
    %v131 = vadd.f32 %v62, %v130
    %v132 = vpop.f32.mrf.mxu0
    %133 = vmatprep.mubr.f32.mxu0 0.0
    %134 = vmatmul.mubr.f32.gmra.mxu0 %v40
    %v135 = vpop.f32.mrf.mxu0
    %v136 = vadd.f32 %v62, %v135
    %v137 = vpop.f32.mrf.mxu0
    %138 = vdwg.mxu0
    %v139 = vmax.f32 %v131, 0.0
    %v140 = vmax.f32 %v136, 0.0
    %v141 = vld [vmem:[%s4] sm:$0xff]
    %v142 = vld [vmem:[%s4 + $0x8] sm:$0xff]
    %v143 = vld [vmem:[%s4 + $0x10] sm:$0xff]
    %v144 = vld [vmem:[%s4 + $0x18] sm:$0xff]
    %v145 = vld [vmem:[%s4 + $0x20] sm:$0xff]
    %v146 = vld [vmem:[%s4 + $0x28] sm:$0xff]
    %v147 = vld [vmem:[%s4 + $0x30] sm:$0xff]
    %v148 = vld [vmem:[%s4 + $0x38] sm:$0xff]
    %v149 = vld [vmem:[%s4 + $0x40] sm:$0xff]
    %v150 = vld [vmem:[%s4 + $0x48] sm:$0xff]
    %v151 = vld [vmem:[%s4 + $0x50] sm:$0xff]
    %v152 = vld [vmem:[%s4 + $0x58] sm:$0xff]
    %v153 = vld [vmem:[%s4 + $0x60] sm:$0xff]
    %v154 = vld [vmem:[%s4 + $0x68] sm:$0xff]
    %v155 = vld [vmem:[%s4 + $0x70] sm:$0xff]
    %v156 = vld [vmem:[%s4 + $0x78] sm:$0xff]
    %v157 = vld [vmem:[%s4 + $0x80] sm:$0xff]
    %v158 = vld [vmem:[%s4 + $0x88] sm:$0xff]
    %v159 = vld [vmem:[%s4 + $0x90] sm:$0xff]
    %v160 = vld [vmem:[%s4 + $0x98] sm:$0xff]
    %v161 = vld [vmem:[%s4 + $0xa0] sm:$0xff]
    %v162 = vld [vmem:[%s4 + $0xa8] sm:$0xff]
    %v163 = vld [vmem:[%s4 + $0xb0] sm:$0xff]
    %v164 = vld [vmem:[%s4 + $0xb8] sm:$0xff]
    %v165 = vld [vmem:[%s4 + $0xc0] sm:$0xff]
    %v166 = vld [vmem:[%s4 + $0xc8] sm:$0xff]
    %v167 = vld [vmem:[%s4 + $0xd0] sm:$0xff]
    %v168 = vld [vmem:[%s4 + $0xd8] sm:$0xff]
    %v169 = vld [vmem:[%s4 + $0xe0] sm:$0xff]
    %v170 = vld [vmem:[%s4 + $0xe8] sm:$0xff]
    %v171 = vld [vmem:[%s4 + $0xf0] sm:$0xff]
    %v172 = vld [vmem:[%s4 + $0xf8] sm:$0xff]
    %v173 = vld [vmem:[%s5] sm:$0x3]
    %v175 = vlaneseq
    %v176 = vshrl.u32 %v175, 7
    %v177 = vsub.s32 0, %v176
    %v178 = vrot.slane %v173, %v177
    %v179 = vlaneseq
    %v180 = vshrl.u32 %v179, 7
    %v181 = vsub.s32 1, %v180
    %v182 = vrot.slane %v173, %v181
    %185 = vmatprep.subr.mxu0 %v172
    %186 = vmatpush1.msra.mxu0 %v171
    %187 = vmatprep.subr.mxu0 %v170
    %188 = vmatpush1.msra.mxu0 %v169
    %189 = vmatprep.subr.mxu0 %v168
    %190 = vmatpush1.msra.mxu0 %v167
    %191 = vmatprep.subr.mxu0 %v166
    %192 = vmatpush1.msra.mxu0 %v165
    %193 = vmatprep.subr.mxu0 %v164
    %194 = vmatpush1.msra.mxu0 %v163
    %195 = vmatprep.subr.mxu0 %v162
    %196 = vmatpush1.msra.mxu0 %v161
    %197 = vmatprep.subr.mxu0 %v160
    %198 = vmatpush1.msra.mxu0 %v159
    %199 = vmatprep.subr.mxu0 %v158
    %200 = vmatpush1.msra.mxu0 %v157
    %201 = vmatprep.subr.mxu0 %v156
    %202 = vmatpush1.msra.mxu0 %v155
    %203 = vmatprep.subr.mxu0 %v154
    %204 = vmatpush1.msra.mxu0 %v153
    %205 = vmatprep.subr.mxu0 %v152
    %206 = vmatpush1.msra.mxu0 %v151
    %207 = vmatprep.subr.mxu0 %v150
    %208 = vmatpush1.msra.mxu0 %v149
    %209 = vmatprep.subr.mxu0 %v148
    %210 = vmatpush1.msra.mxu0 %v147
    %211 = vmatprep.subr.mxu0 %v146
    %212 = vmatpush1.msra.mxu0 %v145
    %213 = vmatprep.subr.mxu0 %v144
    %214 = vmatpush1.msra.mxu0 %v143
    %215 = vmatprep.subr.mxu0 %v142
    %216 = vmatpush1.msra.mxu0 %v141
    %217 = vmatprep.subr.mxu0 0.0
    %218 = vmatpush2.msra.mxu0 0.0
    %219 = vmatprep.subr.mxu0 0.0
    %220 = vmatpush2.msra.mxu0 0.0
    %221 = vmatprep.subr.mxu0 0.0
    %222 = vmatpush2.msra.mxu0 0.0
    %223 = vmatprep.subr.mxu0 0.0
    %224 = vmatpush2.msra.mxu0 0.0
    %225 = vmatprep.subr.mxu0 0.0
    %226 = vmatpush2.msra.mxu0 0.0
    %227 = vmatprep.subr.mxu0 0.0
    %228 = vmatpush2.msra.mxu0 0.0
    %229 = vmatprep.subr.mxu0 0.0
    %230 = vmatpush2.msra.mxu0 0.0
    %231 = vmatprep.subr.mxu0 0.0
    %232 = vmatpush2.msra.mxu0 0.0
    %233 = vmatprep.subr.mxu0 0.0
    %234 = vmatpush2.msra.mxu0 0.0
    %235 = vmatprep.subr.mxu0 0.0
    %236 = vmatpush2.msra.mxu0 0.0
    %237 = vmatprep.subr.mxu0 0.0
    %238 = vmatpush2.msra.mxu0 0.0
    %239 = vmatprep.subr.mxu0 0.0
    %240 = vmatpush2.msra.mxu0 0.0
    %241 = vmatprep.subr.mxu0 0.0
    %242 = vmatpush2.msra.mxu0 0.0
    %243 = vmatprep.subr.mxu0 0.0
    %244 = vmatpush2.msra.mxu0 0.0
    %245 = vmatprep.subr.mxu0 0.0
    %246 = vmatpush2.msra.mxu0 0.0
    %247 = vmatprep.subr.mxu0 0.0
    %248 = vmatpush2.msra.mxu0 0.0
    %249 = vmatprep.mubr.f32.mxu0 0.0
    %250 = vmatmul.mubr.f32.gmra.mxu0 %v139
    %v251 = vpop.f32.mrf.mxu0
    %v252 = vadd.f32 %v178, %v251
    %v253 = vpop.f32.mrf.mxu0
    %v254 = vadd.f32 %v182, %v253
    %255 = vmatprep.mubr.f32.mxu0 0.0
    %256 = vmatmul.mubr.f32.gmra.mxu0 %v140
    %v257 = vpop.f32.mrf.mxu0
    %v258 = vadd.f32 %v178, %v257
    %v259 = vpop.f32.mrf.mxu0
    %v260 = vadd.f32 %v182, %v259
    %261 = vdwg.mxu0
    %v262 = vmax.f32 %v254, 0.0
    %v263 = vmax.f32 %v260, 0.0
    %v264 = vand.u32 2147483647, %v254
    %v265 = vand.u32 2147483647, %v260
    %v266 = vsub.f32 0.0, %v264
    %v267 = vsub.f32 0.0, %v265
    %v268 = vmul.f32 %v266, 1.442695
    %v269 = vpow.pop %v268
    %v270 = vmul.f32 %v267, 1.442695
    %v271 = vpow.pop %v270
    %v272 = vadd.f32 %v269, 1.0
    %v273 = vlog2.pop %v272
    %v274 = vmul.f32 %v273, 0.6931472
    %v275 = vmul.f32 -0.5, %v269
    %v276 = vadd.f32 %v275, 1.0
    %v277 = vmul.f32 %v276, %v269
    %v278 = vand.u32 2147483647, %v269
    %vm279 = vcmp.lt.f32.partialorder %v278, 0.0004427343
    %v280 = vsel %vm279, %v277, %v274
    %v281 = vadd.f32 %v271, 1.0
    %v282 = vlog2.pop %v281
    %v283 = vmul.f32 %v282, 0.6931472
    %v284 = vmul.f32 -0.5, %v271
    %v285 = vadd.f32 %v284, 1.0
    %v286 = vmul.f32 %v285, %v271
    %v287 = vand.u32 2147483647, %v271
    %vm288 = vcmp.lt.f32.partialorder %v287, 0.0004427343
    %v289 = vsel %vm288, %v286, %v283
    %v290 = vadd.f32 %v262, %v280
    %v291 = vadd.f32 %v263, %v289
    %v292 = vrsqrt.pop %v290
    %v293 = vmul.f32 %v290, %v292
    %vm294 = vcmp.eq.f32.partialorder %v290, inf
    %v295 = vsel %vm294, %v290, %v293
    %vm296 = vcmp.eq.f32.partialorder %v290, 0.0
    %v297 = vand.u32 %v290, 2147483648
    %v298 = vsel %vm296, %v297, %v295
    %v299 = vrsqrt.pop %v291
    %v300 = vmul.f32 %v291, %v299
    %vm301 = vcmp.eq.f32.partialorder %v291, inf
    %v302 = vsel %vm301, %v291, %v300
    %vm303 = vcmp.eq.f32.partialorder %v291, 0.0
    %v304 = vand.u32 %v291, 2147483648
    %v305 = vsel %vm303, %v304, %v302
    %v306 = vld [vmem:[%s1] sm:$0xff]
    %v307 = vld [vmem:[%s1 + $0x8] sm:$0xff]
    %v308 = vmul.f32 %v298, %v306
    %v309 = vmul.f32 %v305, %v307
    %v310 = vadd.f32 %v252, %v308
    %v311 = vadd.f32 %v258, %v309
    %v312 = vld [vmem:[%s6] sm:$0xff]
    %v313 = vld [vmem:[%s6 + $0x8] sm:$0xff]
    %v314 = vld [vmem:[%s6 + $0x10] sm:$0xff]
    %v315 = vld [vmem:[%s6 + $0x18] sm:$0xff]
    %v316 = vld [vmem:[%s6 + $0x20] sm:$0xff]
    %v317 = vld [vmem:[%s6 + $0x28] sm:$0xff]
    %v318 = vld [vmem:[%s6 + $0x30] sm:$0xff]
    %v319 = vld [vmem:[%s6 + $0x38] sm:$0xff]
    %v320 = vld [vmem:[%s6 + $0x40] sm:$0xff]
    %v321 = vld [vmem:[%s6 + $0x48] sm:$0xff]
    %v322 = vld [vmem:[%s6 + $0x50] sm:$0xff]
    %v323 = vld [vmem:[%s6 + $0x58] sm:$0xff]
    %v324 = vld [vmem:[%s6 + $0x60] sm:$0xff]
    %v325 = vld [vmem:[%s6 + $0x68] sm:$0xff]
    %v326 = vld [vmem:[%s6 + $0x70] sm:$0xff]
    %v327 = vld [vmem:[%s6 + $0x78] sm:$0xff]
    %v328 = vld [vmem:[%s7] sm:$0x1]
    %v330 = vlaneseq
    %v331 = vshrl.u32 %v330, 7
    %v332 = vsub.s32 0, %v331
    %v333 = vrot.slane %v328, %v332
    %335 = vmatprep.subr.mxu0 0.0
    %336 = vmatpush1.msra.mxu0 %v327
    %337 = vmatprep.subr.mxu0 0.0
    %338 = vmatpush1.msra.mxu0 %v326
    %339 = vmatprep.subr.mxu0 0.0
    %340 = vmatpush1.msra.mxu0 %v325
    %341 = vmatprep.subr.mxu0 0.0
    %342 = vmatpush1.msra.mxu0 %v324
    %343 = vmatprep.subr.mxu0 0.0
    %344 = vmatpush1.msra.mxu0 %v323
    %345 = vmatprep.subr.mxu0 0.0
    %346 = vmatpush1.msra.mxu0 %v322
    %347 = vmatprep.subr.mxu0 0.0
    %348 = vmatpush1.msra.mxu0 %v321
    %349 = vmatprep.subr.mxu0 0.0
    %350 = vmatpush1.msra.mxu0 %v320
    %351 = vmatprep.subr.mxu0 0.0
    %352 = vmatpush1.msra.mxu0 %v319
    %353 = vmatprep.subr.mxu0 0.0
    %354 = vmatpush1.msra.mxu0 %v318
    %355 = vmatprep.subr.mxu0 0.0
    %356 = vmatpush1.msra.mxu0 %v317
    %357 = vmatprep.subr.mxu0 0.0
    %358 = vmatpush1.msra.mxu0 %v316
    %359 = vmatprep.subr.mxu0 0.0
    %360 = vmatpush1.msra.mxu0 %v315
    %361 = vmatprep.subr.mxu0 0.0
    %362 = vmatpush1.msra.mxu0 %v314
    %363 = vmatprep.subr.mxu0 0.0
    %364 = vmatpush1.msra.mxu0 %v313
    %365 = vmatprep.subr.mxu0 0.0
    %366 = vmatpush1.msra.mxu0 %v312
    %367 = vmatprep.subr.mxu0 0.0
    %368 = vmatpush2.msra.mxu0 0.0
    %369 = vmatprep.subr.mxu0 0.0
    %370 = vmatpush2.msra.mxu0 0.0
    %371 = vmatprep.subr.mxu0 0.0
    %372 = vmatpush2.msra.mxu0 0.0
    %373 = vmatprep.subr.mxu0 0.0
    %374 = vmatpush2.msra.mxu0 0.0
    %375 = vmatprep.subr.mxu0 0.0
    %376 = vmatpush2.msra.mxu0 0.0
    %377 = vmatprep.subr.mxu0 0.0
    %378 = vmatpush2.msra.mxu0 0.0
    %379 = vmatprep.subr.mxu0 0.0
    %380 = vmatpush2.msra.mxu0 0.0
    %381 = vmatprep.subr.mxu0 0.0
    %382 = vmatpush2.msra.mxu0 0.0
    %383 = vmatprep.subr.mxu0 0.0
    %384 = vmatpush2.msra.mxu0 0.0
    %385 = vmatprep.subr.mxu0 0.0
    %386 = vmatpush2.msra.mxu0 0.0
    %387 = vmatprep.subr.mxu0 0.0
    %388 = vmatpush2.msra.mxu0 0.0
    %389 = vmatprep.subr.mxu0 0.0
    %390 = vmatpush2.msra.mxu0 0.0
    %391 = vmatprep.subr.mxu0 0.0
    %392 = vmatpush2.msra.mxu0 0.0
    %393 = vmatprep.subr.mxu0 0.0
    %394 = vmatpush2.msra.mxu0 0.0
    %395 = vmatprep.subr.mxu0 0.0
    %396 = vmatpush2.msra.mxu0 0.0
    %397 = vmatprep.subr.mxu0 0.0
    %398 = vmatpush2.msra.mxu0 0.0
    %399 = vmatprep.mubr.f32.mxu0 0.0
    %400 = vmatmul.mubr.f32.gmra.mxu0 %v310
    %v401 = vpop.f32.mrf.mxu0
    %v402 = vadd.f32 %v333, %v401
    %v403 = vpop.f32.mrf.mxu0
    %404 = vmatprep.mubr.f32.mxu0 0.0
    %405 = vmatmul.mubr.f32.gmra.mxu0 %v311
    %v406 = vpop.f32.mrf.mxu0
    %v407 = vadd.f32 %v333, %v406
    %v408 = vpop.f32.mrf.mxu0
    %409 = vdwg.mxu0
    %v410 = vmax.f32 %v402, 0.0
    %v411 = vmax.f32 %v407, 0.0
    %v412 = vld [vmem:[%s8] sm:$0xff]
    %v413 = vld [vmem:[%s8 + $0x8] sm:$0xff]
    %v414 = vld [vmem:[%s8 + $0x10] sm:$0xff]
    %v415 = vld [vmem:[%s8 + $0x18] sm:$0xff]
    %v416 = vld [vmem:[%s8 + $0x20] sm:$0xff]
    %v417 = vld [vmem:[%s8 + $0x28] sm:$0xff]
    %v418 = vld [vmem:[%s8 + $0x30] sm:$0xff]
    %v419 = vld [vmem:[%s8 + $0x38] sm:$0xff]
    %v420 = vld [vmem:[%s8 + $0x40] sm:$0xff]
    %v421 = vld [vmem:[%s8 + $0x48] sm:$0xff]
    %v422 = vld [vmem:[%s8 + $0x50] sm:$0xff]
    %v423 = vld [vmem:[%s8 + $0x58] sm:$0xff]
    %v424 = vld [vmem:[%s8 + $0x60] sm:$0xff]
    %v425 = vld [vmem:[%s8 + $0x68] sm:$0xff]
    %v426 = vld [vmem:[%s8 + $0x70] sm:$0xff]
    %v427 = vld [vmem:[%s8 + $0x78] sm:$0xff]
    %v428 = vld [vmem:[%s9] sm:$0x1]
    %v430 = vlaneseq
    %v431 = vshrl.u32 %v430, 7
    %v432 = vsub.s32 0, %v431
    %v433 = vrot.slane %v428, %v432
    %435 = vmatprep.subr.mxu0 0.0
    %436 = vmatpush1.msra.mxu0 %v427
    %437 = vmatprep.subr.mxu0 0.0
    %438 = vmatpush1.msra.mxu0 %v426
    %439 = vmatprep.subr.mxu0 0.0
    %440 = vmatpush1.msra.mxu0 %v425
    %441 = vmatprep.subr.mxu0 0.0
    %442 = vmatpush1.msra.mxu0 %v424
    %443 = vmatprep.subr.mxu0 0.0
    %444 = vmatpush1.msra.mxu0 %v423
    %445 = vmatprep.subr.mxu0 0.0
    %446 = vmatpush1.msra.mxu0 %v422
    %447 = vmatprep.subr.mxu0 0.0
    %448 = vmatpush1.msra.mxu0 %v421
    %449 = vmatprep.subr.mxu0 0.0
    %450 = vmatpush1.msra.mxu0 %v420
    %451 = vmatprep.subr.mxu0 0.0
    %452 = vmatpush1.msra.mxu0 %v419
    %453 = vmatprep.subr.mxu0 0.0
    %454 = vmatpush1.msra.mxu0 %v418
    %455 = vmatprep.subr.mxu0 0.0
    %456 = vmatpush1.msra.mxu0 %v417
    %457 = vmatprep.subr.mxu0 0.0
    %458 = vmatpush1.msra.mxu0 %v416
    %459 = vmatprep.subr.mxu0 0.0
    %460 = vmatpush1.msra.mxu0 %v415
    %461 = vmatprep.subr.mxu0 0.0
    %462 = vmatpush1.msra.mxu0 %v414
    %463 = vmatprep.subr.mxu0 0.0
    %464 = vmatpush1.msra.mxu0 %v413
    %465 = vmatprep.subr.mxu0 0.0
    %466 = vmatpush1.msra.mxu0 %v412
    %467 = vmatprep.subr.mxu0 0.0
    %468 = vmatpush2.msra.mxu0 0.0
    %469 = vmatprep.subr.mxu0 0.0
    %470 = vmatpush2.msra.mxu0 0.0
    %471 = vmatprep.subr.mxu0 0.0
    %472 = vmatpush2.msra.mxu0 0.0
    %473 = vmatprep.subr.mxu0 0.0
    %474 = vmatpush2.msra.mxu0 0.0
    %475 = vmatprep.subr.mxu0 0.0
    %476 = vmatpush2.msra.mxu0 0.0
    %477 = vmatprep.subr.mxu0 0.0
    %478 = vmatpush2.msra.mxu0 0.0
    %479 = vmatprep.subr.mxu0 0.0
    %480 = vmatpush2.msra.mxu0 0.0
    %481 = vmatprep.subr.mxu0 0.0
    %482 = vmatpush2.msra.mxu0 0.0
    %483 = vmatprep.subr.mxu0 0.0
    %484 = vmatpush2.msra.mxu0 0.0
    %485 = vmatprep.subr.mxu0 0.0
    %486 = vmatpush2.msra.mxu0 0.0
    %487 = vmatprep.subr.mxu0 0.0
    %488 = vmatpush2.msra.mxu0 0.0
    %489 = vmatprep.subr.mxu0 0.0
    %490 = vmatpush2.msra.mxu0 0.0
    %491 = vmatprep.subr.mxu0 0.0
    %492 = vmatpush2.msra.mxu0 0.0
    %493 = vmatprep.subr.mxu0 0.0
    %494 = vmatpush2.msra.mxu0 0.0
    %495 = vmatprep.subr.mxu0 0.0
    %496 = vmatpush2.msra.mxu0 0.0
    %497 = vmatprep.subr.mxu0 0.0
    %498 = vmatpush2.msra.mxu0 0.0
    %499 = vmatprep.mubr.f32.mxu0 0.0
    %500 = vmatmul.mubr.f32.gmra.mxu0 %v410
    %v501 = vpop.f32.mrf.mxu0
    %v502 = vadd.f32 %v433, %v501
    %v503 = vpop.f32.mrf.mxu0
    %504 = vmatprep.mubr.f32.mxu0 0.0
    %505 = vmatmul.mubr.f32.gmra.mxu0 %v411
    %v506 = vpop.f32.mrf.mxu0
    %v507 = vadd.f32 %v433, %v506
    %v508 = vpop.f32.mrf.mxu0
    %509 = vdwg.mxu0
    %v510 = vxor.u32 %v502, 2147483648
    %v511 = vxor.u32 %v507, 2147483648
    %v512 = vmul.f32 %v510, 1.442695
    %v513 = vpow.pop %v512
    %v514 = vmul.f32 %v511, 1.442695
    %v515 = vpow.pop %v514
    %v516 = vadd.f32 %v513, 1.0
    %v517 = vadd.f32 %v515, 1.0
    %v518 = vrcp.pop %v516
    %v519 = vmul.f32 1.0, %v518
    %v520 = vrcp.pop %v517
    %v521 = vmul.f32 1.0, %v520
    %522 = vst [vmem:[#allocation2] sm:$0xff] %v519
    %523 = vst [vmem:[#allocation2 + $0x8] sm:$0xff] %v521
    %524 = vst [vmem:[#allocation4] sm:$0xff] %v310
    %525 = vst [vmem:[#allocation4 + $0x8] sm:$0xff] %v311
    // Predicated region
    $region42: #{vae_forward.1} parent=1 // pred_check
      _
    $region43: #{vae_forward.1} parent=1 // pred_check_branch
      %527 = sbr.rel (0) target = $region45
    $region44: #{vae_forward.1} parent=1 // pred_region
      %s529 = ssub.s32 256, 256
      %530 = vsyncadd [#allocation3], %s529
      %s531 = sshll.u32 [#allocation2], 4
      %s532 = int_to_ptr.vmem [resolvable:$true] %s531
      %537 = dma.vmem_to_hbm [thread:$0]  %s532, 256, %s10, [#allocation3], 128, 128, 8
    $region45: #{vae_forward.1} parent=1 // pred_fallthru
      _
    // Predicated region
    $region46: #{vae_forward.1} parent=1 // pred_check
      _
    $region47: #{vae_forward.1} parent=1 // pred_check_branch
      %539 = sbr.rel (0) target = $region49
    $region48: #{vae_forward.1} parent=1 // pred_region
      %s541 = ssub.s32 256, 256
      %542 = vsyncadd [#allocation5], %s541
      %s543 = sshll.u32 [#allocation4], 4
      %s544 = int_to_ptr.vmem [resolvable:$true] %s543
      %549 = dma.vmem_to_hbm [thread:$0]  %s544, 256, %s11, [#allocation5], 128, 128, 8
    $region49: #{vae_forward.1} parent=1 // pred_fallthru
      _
    // Predicated region
    $region50: #{vae_forward.1} parent=1 // pred_check
      _
    $region51: #{vae_forward.1} parent=1 // pred_check_branch
      %551 = sbr.rel (0) target = $region53
    $region52: #{vae_forward.1} parent=1 // pred_region
      %552 = dma.done [#allocation3], 256
    $region53: #{vae_forward.1} parent=1 // pred_fallthru
      _
    // Predicated region
    $region54: #{vae_forward.1} parent=1 // pred_check
      _
    $region55: #{vae_forward.1} parent=1 // pred_check_branch
      %554 = sbr.rel (0) target = $region57
    $region56: #{vae_forward.1} parent=1 // pred_region
      %555 = dma.done [#allocation5], 256
    $region57: #{vae_forward.1} parent=1 // pred_fallthru
      _
    %556 = vsyncpa [#allocation3], 1
    %557 = vsyncpa [#allocation5], 1

</llo_original>
